<compile_context>
chip_gen: v7x
topology: tpu7x:2x2x1
jax: 0.10.0
libtpu: 0.0.40
codegen_flags: <defaults>
</compile_context>

<pallas_src>
import jax
import jax.numpy as jnp
from jax.experimental import pallas as pl
from jax.experimental.pallas import tpu as pltpu


def _classifier_kernel(x_ref, w1_ref, b1_ref, w2_ref, b2_ref, w3_ref, b3_ref, o_ref):
    # Cast the f32 input tile to bf16 in-kernel (cheap VPU cast, hidden under DMA).
    x = x_ref[...].astype(w1_ref.dtype)
    # Layer 1: Linear(n_features -> 2*n_hidden) + ReLU  (bf16 operands, f32 acc)
    h1 = jnp.dot(x, w1_ref[...], preferred_element_type=jnp.float32)
    h1 = jnp.maximum(h1 + b1_ref[...], 0.0)
    # TODO(synk): nn.Dropout(p=0.2) in training mode is stochastic; implemented
    # here as identity (eval-mode semantics).  If training dropout is needed,
    # use pltpu.prng_seed + pltpu.prng_random_bits in-kernel.
    # Layer 2: Linear(2*n_hidden -> n_hidden) + ReLU
    h2 = jnp.dot(h1.astype(w2_ref.dtype), w2_ref[...],
                 preferred_element_type=jnp.float32)
    h2 = jnp.maximum(h2 + b2_ref[...], 0.0)
    # Layer 3: Linear(n_hidden -> n_class)  (narrow output, masked store is fine)
    out = jnp.dot(h2.astype(w3_ref.dtype), w3_ref[...],
                  preferred_element_type=jnp.float32) + b3_ref[...]
    o_ref[...] = out.astype(o_ref.dtype)


def _round_up(x, m):
    return (x + m - 1) // m * m


def classifier_forward(x, params, *, tile_b=8192, mxu_m=128,
                       compute_dtype=jnp.bfloat16):
    """x: (B, n_features) f32.  params: dict of w1,b1,w2,b2,w3,b3."""
    B, F = x.shape
    w1, b1 = params["w1"], params["b1"]   # (F, 2H), (1, 2H)
    w2, b2 = params["w2"], params["b2"]   # (2H, H), (1, H)
    w3, b3 = params["w3"], params["b3"]   # (H, C),  (1, C)
    H2, H, C = w1.shape[1], w2.shape[1], w3.shape[1]

    # Tile size: MXU-multiple granularity; for small batches clamp so the grid
    # keeps >=2 parallel steps (megacore sharding on v7x).
    tile_b = max(mxu_m, _round_up(tile_b, mxu_m))
    tile_b = min(tile_b, max(mxu_m, _round_up(pl.cdiv(B, 2), mxu_m)))

    # Pad the batch to a tile multiple (padded rows sliced off at the end).
    B_pad = _round_up(B, tile_b)
    if B_pad != B:
        x = jnp.zeros((B_pad, F), x.dtype).at[:B].set(x)

    out_dtype = x.dtype
    # Weight casts stay in the wrapper (tiny, grid-invariant); biases stay f32
    # so the bias-add + ReLU epilogue runs on the f32 VPU path (v5e-friendly).
    w1_c = w1.astype(compute_dtype)
    w2_c = w2.astype(compute_dtype)
    w3_c = w3.astype(compute_dtype)
    b1_f = b1.astype(jnp.float32)
    b2_f = b2.astype(jnp.float32)
    b3_f = b3.astype(jnp.float32)

    grid = (B_pad // tile_b,)
    out = pl.pallas_call(
        _classifier_kernel,
        out_shape=jax.ShapeDtypeStruct((B_pad, C), out_dtype),
        grid_spec=pltpu.PrefetchScalarGridSpec(
            num_scalar_prefetch=0,
            grid=grid,
            in_specs=[
                pl.BlockSpec((tile_b, F), lambda i: (i, 0)),   # x tile (f32)
                pl.BlockSpec((F, H2), lambda i: (0, 0)),       # w1 (whole)
                pl.BlockSpec((1, H2), lambda i: (0, 0)),       # b1
                pl.BlockSpec((H2, H), lambda i: (0, 0)),       # w2
                pl.BlockSpec((1, H), lambda i: (0, 0)),        # b2
                pl.BlockSpec((H, C), lambda i: (0, 0)),        # w3 (narrow N=C)
                pl.BlockSpec((1, C), lambda i: (0, 0)),        # b3
            ],
            out_specs=pl.BlockSpec((tile_b, C), lambda i: (i, 0)),
        ),
        compiler_params=pltpu.CompilerParams(
            dimension_semantics=("parallel",),
            vmem_limit_bytes=48 * 1024 * 1024,   # headroom under v7x's 64 MiB VMEM
        ),
    )(x, w1_c, b1_f, w2_c, b2_f, w3_c, b3_f)
    if B_pad != B:
        out = out[:B]
    return out


def init_classifier_params(key, n_features, n_class=2, n_hidden=32,
                           dtype=jnp.float32):
    """Deterministic init mirroring nn.Linear default: U(-1/sqrt(fan_in), +)."""
    def linear(k, fan_in, fan_out):
        kw, kb = jax.random.split(k)
        bound = 1.0 / jnp.sqrt(jnp.asarray(fan_in, dtype))
        w = jax.random.uniform(kw, (fan_in, fan_out), dtype, -bound, bound)
        b = jax.random.uniform(kb, (1, fan_out), dtype, -bound, bound)
        return w, b

    k1, k2, k3 = jax.random.split(key, 3)
    w1, b1 = linear(k1, n_features, n_hidden * 2)
    w2, b2 = linear(k2, n_hidden * 2, n_hidden)
    w3, b3 = linear(k3, n_hidden, n_class)
    return {"w1": w1, "b1": b1, "w2": w2, "b2": b2, "w3": w3, "b3": b3}


if __name__ == "__main__":
    key = jax.random.PRNGKey(0)
    k_x, k_p = jax.random.split(key)

    batch = 512          # exercises 2 parallel grid steps of tile_b=256
    n_features = 16
    n_hidden = 32
    n_class = 2

    x = jax.random.normal(k_x, (batch, n_features), dtype=jnp.float32)
    params = init_classifier_params(k_p, n_features, n_class=n_class,
                                    n_hidden=n_hidden)

    pred = classifier_forward(x, params)
    pred = jax.block_until_ready(pred)
    assert pred.shape == (batch, n_class)

    # Pure-JAX reference with the same bf16-operand / f32-accumulate recipe
    # (eval-mode dropout == identity).
    bf16 = jnp.bfloat16
    h1 = jnp.maximum(
        jnp.dot(x.astype(bf16), params["w1"].astype(bf16),
                preferred_element_type=jnp.float32) + params["b1"], 0.0)
    h2 = jnp.maximum(
        jnp.dot(h1.astype(bf16), params["w2"].astype(bf16),
                preferred_element_type=jnp.float32) + params["b2"], 0.0)
    ref = jnp.dot(h2.astype(bf16), params["w3"].astype(bf16),
                  preferred_element_type=jnp.float32) + params["b3"]
    assert jnp.allclose(pred, ref.astype(pred.dtype), atol=5e-3, rtol=5e-3)

    # Also sanity-check against the full-f32 reference with a bf16-scale tol.
    h1f = jnp.maximum(x @ params["w1"] + params["b1"], 0.0)
    h2f = jnp.maximum(h1f @ params["w2"] + params["b2"], 0.0)
    reff = h2f @ params["w3"] + params["b3"]
    assert jnp.allclose(pred, reff, atol=5e-2, rtol=5e-2)

    print("KERNEL_OK")
</pallas_src>

<mosaic_0001>
module attributes {stable_mosaic.version = 11 : i64} {
  func.func @_classifier_kernel(%arg0: i32, %arg1: memref<256x16xf32, #tpu.memory_space<vmem>>, %arg2: memref<16x64xbf16, #tpu.memory_space<vmem>>, %arg3: memref<1x64xf32, #tpu.memory_space<vmem>>, %arg4: memref<64x32xbf16, #tpu.memory_space<vmem>>, %arg5: memref<1x32xf32, #tpu.memory_space<vmem>>, %arg6: memref<32x2xbf16, #tpu.memory_space<vmem>>, %arg7: memref<1x2xf32, #tpu.memory_space<vmem>>, %arg8: memref<256x2xf32, #tpu.memory_space<vmem>>) attributes {dimension_semantics = [#tpu.dimension_semantics<parallel>], iteration_bounds = array<i64: 2>, scalar_prefetch = 0 : i64, scratch_operands = 0 : i64, tpu.core_type = #tpu.core_type<tc>, window_params = [{transform_indices = @transform_0, window_bounds = array<i64: 256, 16>}, {pipeline_mode = #tpu.pipeline_mode<synchronous>, transform_indices = @transform_1, window_bounds = array<i64: 16, 64>}, {pipeline_mode = #tpu.pipeline_mode<synchronous>, transform_indices = @transform_2, window_bounds = array<i64: 1, 64>}, {pipeline_mode = #tpu.pipeline_mode<synchronous>, transform_indices = @transform_3, window_bounds = array<i64: 64, 32>}, {pipeline_mode = #tpu.pipeline_mode<synchronous>, transform_indices = @transform_4, window_bounds = array<i64: 1, 32>}, {pipeline_mode = #tpu.pipeline_mode<synchronous>, transform_indices = @transform_5, window_bounds = array<i64: 32, 2>}, {pipeline_mode = #tpu.pipeline_mode<synchronous>, transform_indices = @transform_6, window_bounds = array<i64: 1, 2>}, {transform_indices = @transform_7, window_bounds = array<i64: 256, 2>}]} {
    %c0 = arith.constant 0 : index
    %c0_0 = arith.constant 0 : index
    %0 = vector.load %arg1[%c0, %c0_0] : memref<256x16xf32, #tpu.memory_space<vmem>>, vector<256x16xf32>
    %1 = arith.truncf %0 : vector<256x16xf32> to vector<256x16xbf16>
    %c0_1 = arith.constant 0 : index
    %c0_2 = arith.constant 0 : index
    %2 = vector.load %arg2[%c0_1, %c0_2] : memref<16x64xbf16, #tpu.memory_space<vmem>>, vector<16x64xbf16>
    %cst = arith.constant dense<0.000000e+00> : vector<256x64xf32>
    %3 = tpu.matmul %1, %2, %cst {dimension_numbers = #tpu.dot_dimension_numbers<[1], [0], [0], [1], [0, 0, 1, 1], [], []>} : vector<256x16xbf16>, vector<16x64xbf16>, vector<256x64xf32> -> vector<256x64xf32>
    %c0_3 = arith.constant 0 : index
    %c0_4 = arith.constant 0 : index
    %4 = vector.load %arg3[%c0_3, %c0_4] : memref<1x64xf32, #tpu.memory_space<vmem>>, vector<1x64xf32>
    %5 = vector.broadcast %4 : vector<1x64xf32> to vector<256x64xf32>
    %6 = arith.addf %3, %5 : vector<256x64xf32>
    %cst_5 = arith.constant 0.000000e+00 : f32
    %7 = vector.broadcast %cst_5 : f32 to vector<256x64xf32>
    %8 = arith.maximumf %6, %7 : vector<256x64xf32>
    %9 = arith.truncf %8 : vector<256x64xf32> to vector<256x64xbf16>
    %c0_6 = arith.constant 0 : index
    %c0_7 = arith.constant 0 : index
    %10 = vector.load %arg4[%c0_6, %c0_7] : memref<64x32xbf16, #tpu.memory_space<vmem>>, vector<64x32xbf16>
    %cst_8 = arith.constant dense<0.000000e+00> : vector<256x32xf32>
    %11 = tpu.matmul %9, %10, %cst_8 {dimension_numbers = #tpu.dot_dimension_numbers<[1], [0], [0], [1], [0, 0, 1, 1], [], []>} : vector<256x64xbf16>, vector<64x32xbf16>, vector<256x32xf32> -> vector<256x32xf32>
    %c0_9 = arith.constant 0 : index
    %c0_10 = arith.constant 0 : index
    %12 = vector.load %arg5[%c0_9, %c0_10] : memref<1x32xf32, #tpu.memory_space<vmem>>, vector<1x32xf32>
    %13 = vector.broadcast %12 : vector<1x32xf32> to vector<256x32xf32>
    %14 = arith.addf %11, %13 : vector<256x32xf32>
    %cst_11 = arith.constant 0.000000e+00 : f32
    %15 = vector.broadcast %cst_11 : f32 to vector<256x32xf32>
    %16 = arith.maximumf %14, %15 : vector<256x32xf32>
    %17 = arith.truncf %16 : vector<256x32xf32> to vector<256x32xbf16>
    %c0_12 = arith.constant 0 : index
    %c0_13 = arith.constant 0 : index
    %18 = vector.load %arg6[%c0_12, %c0_13] : memref<32x2xbf16, #tpu.memory_space<vmem>>, vector<32x2xbf16>
    %cst_14 = arith.constant dense<0.000000e+00> : vector<256x2xf32>
    %19 = tpu.matmul %17, %18, %cst_14 {dimension_numbers = #tpu.dot_dimension_numbers<[1], [0], [0], [1], [0, 0, 1, 1], [], []>} : vector<256x32xbf16>, vector<32x2xbf16>, vector<256x2xf32> -> vector<256x2xf32>
    %c0_15 = arith.constant 0 : index
    %c0_16 = arith.constant 0 : index
    %20 = vector.load %arg7[%c0_15, %c0_16] : memref<1x2xf32, #tpu.memory_space<vmem>>, vector<1x2xf32>
    %21 = vector.broadcast %20 : vector<1x2xf32> to vector<256x2xf32>
    %22 = arith.addf %19, %21 : vector<256x2xf32>
    %c0_17 = arith.constant 0 : index
    %c0_18 = arith.constant 0 : index
    %23 = vector.load %arg8[%c0_17, %c0_18] : memref<256x2xf32, #tpu.memory_space<vmem>>, vector<256x2xf32>
    tpu.vector_store %arg8[%c0_17, %c0_18], %22 {strides = array<i32>} : memref<256x2xf32, #tpu.memory_space<vmem>>, vector<256x2xf32>,
    return
  }
  func.func @transform_0(%arg0: i32) -> (i32, i32) {
    %c0_i32 = arith.constant 0 : i32
    %c0_i32_0 = arith.constant 0 : i32
    return %arg0, %c0_i32 : i32, i32
  }
  func.func @transform_1(%arg0: i32) -> (i32, i32) {
    %c0_i32 = arith.constant 0 : i32
    %c0_i32_0 = arith.constant 0 : i32
    %c0_i32_1 = arith.constant 0 : i32
    return %c0_i32, %c0_i32_0 : i32, i32
  }
  func.func @transform_2(%arg0: i32) -> (i32, i32) {
    %c0_i32 = arith.constant 0 : i32
    %c0_i32_0 = arith.constant 0 : i32
    %c0_i32_1 = arith.constant 0 : i32
    return %c0_i32, %c0_i32_0 : i32, i32
  }
  func.func @transform_3(%arg0: i32) -> (i32, i32) {
    %c0_i32 = arith.constant 0 : i32
    %c0_i32_0 = arith.constant 0 : i32
    %c0_i32_1 = arith.constant 0 : i32
    return %c0_i32, %c0_i32_0 : i32, i32
  }
  func.func @transform_4(%arg0: i32) -> (i32, i32) {
    %c0_i32 = arith.constant 0 : i32
    %c0_i32_0 = arith.constant 0 : i32
    %c0_i32_1 = arith.constant 0 : i32
    return %c0_i32, %c0_i32_0 : i32, i32
  }
  func.func @transform_5(%arg0: i32) -> (i32, i32) {
    %c0_i32 = arith.constant 0 : i32
    %c0_i32_0 = arith.constant 0 : i32
    %c0_i32_1 = arith.constant 0 : i32
    return %c0_i32, %c0_i32_0 : i32, i32
  }
  func.func @transform_6(%arg0: i32) -> (i32, i32) {
    %c0_i32 = arith.constant 0 : i32
    %c0_i32_0 = arith.constant 0 : i32
    %c0_i32_1 = arith.constant 0 : i32
    return %c0_i32, %c0_i32_0 : i32, i32
  }
  func.func @transform_7(%arg0: i32) -> (i32, i32) {
    %c0_i32 = arith.constant 0 : i32
    %c0_i32_0 = arith.constant 0 : i32
    return %arg0, %c0_i32 : i32, i32
  }
}

</mosaic_0001>

<llo_original>
// kernel: tpu_custom_call.1
$region0: #{tpu_custom_call.1}
  #allocation0 [shape = 'u32[]', space=smem, size = 0x4, offset = 0x4, fixed_abs, tag = 'smem constant byte address 0x4 - core index']
  #allocation1 [shape = 'u32[144,128]{1,0:T(1,128)}', space=vmem, size = 0x12000, scoped, tag = 'internal scratch']
  %s0 = inlined_call_operand.vmem [shape: f32[512,16], index: 0, kind: input, shape index: {}]
  %s1 = inlined_call_operand.vmem [shape: bf16[16,64], index: 1, kind: input, shape index: {}]
  %s2 = inlined_call_operand.vmem [shape: f32[1,64], index: 2, kind: input, shape index: {}]
  %s3 = inlined_call_operand.vmem [shape: bf16[64,32], index: 3, kind: input, shape index: {}]
  %s4 = inlined_call_operand.vmem [shape: f32[1,32], index: 4, kind: input, shape index: {}]
  %s5 = inlined_call_operand.vmem [shape: bf16[32,2], index: 5, kind: input, shape index: {}]
  %s6 = inlined_call_operand.vmem [shape: f32[1,2], index: 6, kind: input, shape index: {}]
  %s7 = inlined_call_operand.vmem [shape: f32[512,2], index: 7, kind: output, shape index: {}]
  %s8 = sld [smem:[#allocation0]]
  $region61: #{tpu_custom_call.1} parent=0
    _
  %s10 = ssub.s32 1, %s8
  %s11 = scalar_select 0, %s10, %s8
  loop: start=0, step=1, limit=4
  $region2: #{tpu_custom_call.1} parent=0 // loop_pre_header
    _
  $region3: #{tpu_custom_call.1} parent=0 // loop_header
    %s13 = sphi 0, %s17
    %p14 = scmp.ge.s32.totalorder %s13, 4
    %s23 = sphi 0, %s25
    %s26 = sphi 0, %s23
    %s27 = sphi 0, %s26
    %s43 = sphi 0, %s27
    %s47 = sphi 0, %s47
    %s49 = sphi 0, %s47
    %s50 = sphi 0, %s49
    %s64 = sphi 0, %s50
    %s68 = sphi 0, %s68
    %s70 = sphi 0, %s68
    %s71 = sphi 0, %s70
    %s85 = sphi 0, %s71
    %s89 = sphi 0, %s89
    %s91 = sphi 0, %s89
    %s92 = sphi 0, %s91
    %s106 = sphi 0, %s92
    %s110 = sphi 0, %s110
    %s112 = sphi 0, %s110
    %s113 = sphi 0, %s112
    %s127 = sphi 0, %s113
    %s131 = sphi 0, %s131
    %s133 = sphi 0, %s131
    %s134 = sphi 0, %s133
    %s148 = sphi 0, %s134
    %s152 = sphi 0, %s152
    %s154 = sphi 0, %s152
    %s155 = sphi 0, %s154
    %s169 = sphi 0, %s155
    %s175 = sphi 0, %s177
    %s178 = sphi 0, %s175
    %s179 = sphi 0, %s178
    %s195 = sphi 0, %s179
  $region4: #{tpu_custom_call.1} parent=0 // loop_header_branch
    %16 = sbr.rel (%p14) target = $region8
  $region5: #{tpu_custom_call.1} parent=0 // loop_body
    %s18 = ssub.s32 %s13, 1
    %s19 = ssub.s32 %s13, 2
    %s20 = sadd.s32 %s13, 1
    %s21 = ssub.s32 %s13, %s20
    %p22 = scmp.eq.s32.totalorder %s21, 0
    %s24 = sadd.s32 %s23, 1
    %s25 = scalar_select %p22, %s23, %s24
    %p28 = pneg %p22
    %p29 = scmp.eq.s32.totalorder %s13, 1
    %p30 = por %p28, %p29
    %p31 = scmp.ne.s32.totalorder %s23, %s26
    %p32 = scmp.eq.s32.totalorder %s13, 0
    %p33 = por %p31, %p32
    %p34 = scmp.ne.s32.totalorder %s23, %s26
    %p35 = scmp.eq.s32.totalorder %s18, 1
    %p36 = por %p34, %p35
    %p37 = scmp.ne.s32.totalorder %s26, %s27
    %p38 = scmp.eq.s32.totalorder %s18, 0
    %p39 = por %p37, %p38
    %p40 = scmp.ne.s32.totalorder %s26, %s27
    %p41 = scmp.eq.s32.totalorder %s19, 1
    %p42 = por %p40, %p41
    %p44 = scmp.ne.s32.totalorder %s27, %s43
    %p45 = scmp.eq.s32.totalorder %s19, 0
    %p46 = por %p44, %p45
    %s48 = sadd.s32 %s47, 1
    %p51 = scmp.eq.s32.totalorder %s13, 1
    %p52 = scmp.ne.s32.totalorder %s47, %s49
    %p53 = scmp.eq.s32.totalorder %s13, 0
    %p54 = por %p52, %p53
    %p55 = scmp.ne.s32.totalorder %s47, %s49
    %p56 = scmp.eq.s32.totalorder %s18, 1
    %p57 = por %p55, %p56
    %p58 = scmp.ne.s32.totalorder %s49, %s50
    %p59 = scmp.eq.s32.totalorder %s18, 0
    %p60 = por %p58, %p59
    %p61 = scmp.ne.s32.totalorder %s49, %s50
    %p62 = scmp.eq.s32.totalorder %s19, 1
    %p63 = por %p61, %p62
    %p65 = scmp.ne.s32.totalorder %s50, %s64
    %p66 = scmp.eq.s32.totalorder %s19, 0
    %p67 = por %p65, %p66
    %s69 = sadd.s32 %s68, 1
    %p72 = scmp.eq.s32.totalorder %s13, 1
    %p73 = scmp.ne.s32.totalorder %s68, %s70
    %p74 = scmp.eq.s32.totalorder %s13, 0
    %p75 = por %p73, %p74
    %p76 = scmp.ne.s32.totalorder %s68, %s70
    %p77 = scmp.eq.s32.totalorder %s18, 1
    %p78 = por %p76, %p77
    %p79 = scmp.ne.s32.totalorder %s70, %s71
    %p80 = scmp.eq.s32.totalorder %s18, 0
    %p81 = por %p79, %p80
    %p82 = scmp.ne.s32.totalorder %s70, %s71
    %p83 = scmp.eq.s32.totalorder %s19, 1
    %p84 = por %p82, %p83
    %p86 = scmp.ne.s32.totalorder %s71, %s85
    %p87 = scmp.eq.s32.totalorder %s19, 0
    %p88 = por %p86, %p87
    %s90 = sadd.s32 %s89, 1
    %p93 = scmp.eq.s32.totalorder %s13, 1
    %p94 = scmp.ne.s32.totalorder %s89, %s91
    %p95 = scmp.eq.s32.totalorder %s13, 0
    %p96 = por %p94, %p95
    %p97 = scmp.ne.s32.totalorder %s89, %s91
    %p98 = scmp.eq.s32.totalorder %s18, 1
    %p99 = por %p97, %p98
    %p100 = scmp.ne.s32.totalorder %s91, %s92
    %p101 = scmp.eq.s32.totalorder %s18, 0
    %p102 = por %p100, %p101
    %p103 = scmp.ne.s32.totalorder %s91, %s92
    %p104 = scmp.eq.s32.totalorder %s19, 1
    %p105 = por %p103, %p104
    %p107 = scmp.ne.s32.totalorder %s92, %s106
    %p108 = scmp.eq.s32.totalorder %s19, 0
    %p109 = por %p107, %p108
    %s111 = sadd.s32 %s110, 1
    %p114 = scmp.eq.s32.totalorder %s13, 1
    %p115 = scmp.ne.s32.totalorder %s110, %s112
    %p116 = scmp.eq.s32.totalorder %s13, 0
    %p117 = por %p115, %p116
    %p118 = scmp.ne.s32.totalorder %s110, %s112
    %p119 = scmp.eq.s32.totalorder %s18, 1
    %p120 = por %p118, %p119
    %p121 = scmp.ne.s32.totalorder %s112, %s113
    %p122 = scmp.eq.s32.totalorder %s18, 0
    %p123 = por %p121, %p122
    %p124 = scmp.ne.s32.totalorder %s112, %s113
    %p125 = scmp.eq.s32.totalorder %s19, 1
    %p126 = por %p124, %p125
    %p128 = scmp.ne.s32.totalorder %s113, %s127
    %p129 = scmp.eq.s32.totalorder %s19, 0
    %p130 = por %p128, %p129
    %s132 = sadd.s32 %s131, 1
    %p135 = scmp.eq.s32.totalorder %s13, 1
    %p136 = scmp.ne.s32.totalorder %s131, %s133
    %p137 = scmp.eq.s32.totalorder %s13, 0
    %p138 = por %p136, %p137
    %p139 = scmp.ne.s32.totalorder %s131, %s133
    %p140 = scmp.eq.s32.totalorder %s18, 1
    %p141 = por %p139, %p140
    %p142 = scmp.ne.s32.totalorder %s133, %s134
    %p143 = scmp.eq.s32.totalorder %s18, 0
    %p144 = por %p142, %p143
    %p145 = scmp.ne.s32.totalorder %s133, %s134
    %p146 = scmp.eq.s32.totalorder %s19, 1
    %p147 = por %p145, %p146
    %p149 = scmp.ne.s32.totalorder %s134, %s148
    %p150 = scmp.eq.s32.totalorder %s19, 0
    %p151 = por %p149, %p150
    %s153 = sadd.s32 %s152, 1
    %p156 = scmp.eq.s32.totalorder %s13, 1
    %p157 = scmp.ne.s32.totalorder %s152, %s154
    %p158 = scmp.eq.s32.totalorder %s13, 0
    %p159 = por %p157, %p158
    %p160 = scmp.ne.s32.totalorder %s152, %s154
    %p161 = scmp.eq.s32.totalorder %s18, 1
    %p162 = por %p160, %p161
    %p163 = scmp.ne.s32.totalorder %s154, %s155
    %p164 = scmp.eq.s32.totalorder %s18, 0
    %p165 = por %p163, %p164
    %p166 = scmp.ne.s32.totalorder %s154, %s155
    %p167 = scmp.eq.s32.totalorder %s19, 1
    %p168 = por %p166, %p167
    %p170 = scmp.ne.s32.totalorder %s155, %s169
    %p171 = scmp.eq.s32.totalorder %s19, 0
    %p172 = por %p170, %p171
    %s173 = ssub.s32 %s13, %s20
    %p174 = scmp.eq.s32.totalorder %s173, 0
    %s176 = sadd.s32 %s175, 1
    %s177 = scalar_select %p174, %s175, %s176
    %p180 = pneg %p174
    %p181 = scmp.eq.s32.totalorder %s13, 1
    %p182 = por %p180, %p181
    %p183 = scmp.ne.s32.totalorder %s175, %s178
    %p184 = scmp.eq.s32.totalorder %s13, 0
    %p185 = por %p183, %p184
    %p186 = scmp.ne.s32.totalorder %s175, %s178
    %p187 = scmp.eq.s32.totalorder %s18, 1
    %p188 = por %p186, %p187
    %p189 = scmp.ne.s32.totalorder %s178, %s179
    %p190 = scmp.eq.s32.totalorder %s18, 0
    %p191 = por %p189, %p190
    %p192 = scmp.ne.s32.totalorder %s178, %s179
    %p193 = scmp.eq.s32.totalorder %s19, 1
    %p194 = por %p192, %p193
    %p196 = scmp.ne.s32.totalorder %s179, %s195
    %p197 = scmp.eq.s32.totalorder %s19, 0
    %p198 = por %p196, %p197
    %p199 = scmp.le.s32.totalorder 1, %s13
    %p200 = scmp.lt.s32.totalorder %s13, 3
    %p201 = pnand %p199, %p200
    %p202 = pneg %p201
    // Predicated region
    $region9: #{tpu_custom_call.1} parent=5 // pred_check
      _
    $region10: #{tpu_custom_call.1} parent=5 // pred_check_branch
      %204 = sbr.rel (%p201) target = $region12
    $region11: #{tpu_custom_call.1} parent=5 // pred_region
      %s205 = ssub.s32 %s13, 1
      // Predicated region
      $region13: #{tpu_custom_call.1} parent=11 // pred_check
        %p206 = pneg %p60
      $region14: #{tpu_custom_call.1} parent=11 // pred_check_branch
        %208 = sbr.rel (%p206) target = $region16
      $region15: #{tpu_custom_call.1} parent=11 // pred_region
        _
      $region16: #{tpu_custom_call.1} parent=11 // pred_fallthru
        _
      // Predicated region
      $region17: #{tpu_custom_call.1} parent=11 // pred_check
        %p209 = pneg %p81
      $region18: #{tpu_custom_call.1} parent=11 // pred_check_branch
        %211 = sbr.rel (%p209) target = $region20
      $region19: #{tpu_custom_call.1} parent=11 // pred_region
        _
      $region20: #{tpu_custom_call.1} parent=11 // pred_fallthru
        _
      // Predicated region
      $region21: #{tpu_custom_call.1} parent=11 // pred_check
        %p212 = pneg %p102
      $region22: #{tpu_custom_call.1} parent=11 // pred_check_branch
        %214 = sbr.rel (%p212) target = $region24
      $region23: #{tpu_custom_call.1} parent=11 // pred_region
        _
      $region24: #{tpu_custom_call.1} parent=11 // pred_fallthru
        _
      // Predicated region
      $region25: #{tpu_custom_call.1} parent=11 // pred_check
        %p215 = pneg %p123
      $region26: #{tpu_custom_call.1} parent=11 // pred_check_branch
        %217 = sbr.rel (%p215) target = $region28
      $region27: #{tpu_custom_call.1} parent=11 // pred_region
        _
      $region28: #{tpu_custom_call.1} parent=11 // pred_fallthru
        _
      // Predicated region
      $region29: #{tpu_custom_call.1} parent=11 // pred_check
        %p218 = pneg %p144
      $region30: #{tpu_custom_call.1} parent=11 // pred_check_branch
        %220 = sbr.rel (%p218) target = $region32
      $region31: #{tpu_custom_call.1} parent=11 // pred_region
        _
      $region32: #{tpu_custom_call.1} parent=11 // pred_fallthru
        _
      // Predicated region
      $region33: #{tpu_custom_call.1} parent=11 // pred_check
        %p221 = pneg %p165
      $region34: #{tpu_custom_call.1} parent=11 // pred_check_branch
        %223 = sbr.rel (%p221) target = $region36
      $region35: #{tpu_custom_call.1} parent=11 // pred_region
        _
      $region36: #{tpu_custom_call.1} parent=11 // pred_fallthru
        _
    $region12: #{tpu_custom_call.1} parent=5 // pred_fallthru
      _
    %p224 = scmp.lt.s32.totalorder %s13, 2
    // Predicated region
    $region37: #{tpu_custom_call.1} parent=5 // pred_check
      %p225 = pneg %p224
    $region38: #{tpu_custom_call.1} parent=5 // pred_check_branch
      %227 = sbr.rel (%p225) target = $region40
    $region39: #{tpu_custom_call.1} parent=5 // pred_region
      // Predicated region
      $region41: #{tpu_custom_call.1} parent=39 // pred_check
        %p228 = pneg %p33
      $region42: #{tpu_custom_call.1} parent=39 // pred_check_branch
        %230 = sbr.rel (%p228) target = $region44
      $region43: #{tpu_custom_call.1} parent=39 // pred_region
        %s231 = smul.u32 32, %s13
        %p232 = scmp.lt.s32.totalorder %s231, 63
        %s233 = scalar_select %p232, %s231, 63
        %s234 = smul.addr %s233, 8
        %s235 = scalar_lea.vmem %s0, %s234
        %s236 = smul.u32 32, %s13
      $region44: #{tpu_custom_call.1} parent=39 // pred_fallthru
        _
    $region40: #{tpu_custom_call.1} parent=5 // pred_fallthru
      _
    %p237 = scmp.le.s32.totalorder 1, %s13
    %p238 = scmp.lt.s32.totalorder %s13, 3
    %p239 = pnand %p237, %p238
    %p240 = pneg %p239
    // Predicated region
    $region45: #{tpu_custom_call.1} parent=5 // pred_check
      _
    $region46: #{tpu_custom_call.1} parent=5 // pred_check_branch
      %242 = sbr.rel (%p239) target = $region48
    $region47: #{tpu_custom_call.1} parent=5 // pred_region
      %s243 = ssub.s32 %s13, 1
      %s244 = smul.u32 32, %s18
      %p245 = scmp.lt.s32.totalorder %s244, 63
      %s246 = scalar_select %p245, %s244, 63
      %s247 = smul.addr %s246, 8
      %s248 = scalar_lea.vmem %s0, %s247
      %p249 = pneg %p39
      %p250 = pneg %p36
      %p251 = pneg %p60
      %p252 = pneg %p57
      %p253 = pneg %p81
      %p254 = pneg %p78
      %p255 = pneg %p102
      %p256 = pneg %p99
      %p257 = pneg %p123
      %p258 = pneg %p120
      %p259 = pneg %p144
      %p260 = pneg %p141
      %p261 = pneg %p165
      %p262 = pneg %p162
      %p263 = pneg %p191
      %p264 = pneg %p188
      %s265 = smul.u32 32, %s18
      %p266 = scmp.lt.s32.totalorder %s265, 63
      %s267 = scalar_select %p266, %s265, 63
      %s268 = smul.addr %s267, 8
      %s269 = scalar_lea.vmem %s7, %s268
      %s270 = smul.u32 32, %s18
      %p271 = scmp.lt.s32.totalorder %s270, 63
      %s272 = scalar_select %p271, %s270, 63
      %s273 = smul.addr %s272, 8
      %s274 = scalar_lea.vmem %s0, %s273
      %s275 = smul.u32 32, %s18
      %s276 = smul.u32 32, %s18
      %p277 = scmp.lt.s32.totalorder %s276, 63
      %s278 = scalar_select %p277, %s276, 63
      %s279 = smul.addr %s278, 8
      %s280 = scalar_lea.vmem %s7, %s279
      %s281 = smul.u32 32, %s18
      %v283 = vld [vmem:[%s274] sm:$0xff]
      %v284 = vld [vmem:[%s274 + $0x8] sm:$0xff]
      %v285 = vld [vmem:[%s274 + $0x10] sm:$0xff]
      %v286 = vld [vmem:[%s274 + $0x18] sm:$0xff]
      %v287 = vld [vmem:[%s274 + $0x20] sm:$0xff]
      %v288 = vld [vmem:[%s274 + $0x28] sm:$0xff]
      %v289 = vld [vmem:[%s274 + $0x30] sm:$0xff]
      %v290 = vld [vmem:[%s274 + $0x38] sm:$0xff]
      %v291 = vld [vmem:[%s274 + $0x40] sm:$0xff]
      %v292 = vld [vmem:[%s274 + $0x48] sm:$0xff]
      %v293 = vld [vmem:[%s274 + $0x50] sm:$0xff]
      %v294 = vld [vmem:[%s274 + $0x58] sm:$0xff]
      %v295 = vld [vmem:[%s274 + $0x60] sm:$0xff]
      %v296 = vld [vmem:[%s274 + $0x68] sm:$0xff]
      %v297 = vld [vmem:[%s274 + $0x70] sm:$0xff]
      %v298 = vld [vmem:[%s274 + $0x78] sm:$0xff]
      %v299 = vld [vmem:[%s274 + $0x80] sm:$0xff]
      %v300 = vld [vmem:[%s274 + $0x88] sm:$0xff]
      %v301 = vld [vmem:[%s274 + $0x90] sm:$0xff]
      %v302 = vld [vmem:[%s274 + $0x98] sm:$0xff]
      %v303 = vld [vmem:[%s274 + $0xa0] sm:$0xff]
      %v304 = vld [vmem:[%s274 + $0xa8] sm:$0xff]
      %v305 = vld [vmem:[%s274 + $0xb0] sm:$0xff]
      %v306 = vld [vmem:[%s274 + $0xb8] sm:$0xff]
      %v307 = vld [vmem:[%s274 + $0xc0] sm:$0xff]
      %v308 = vld [vmem:[%s274 + $0xc8] sm:$0xff]
      %v309 = vld [vmem:[%s274 + $0xd0] sm:$0xff]
      %v310 = vld [vmem:[%s274 + $0xd8] sm:$0xff]
      %v311 = vld [vmem:[%s274 + $0xe0] sm:$0xff]
      %v312 = vld [vmem:[%s274 + $0xe8] sm:$0xff]
      %v313 = vld [vmem:[%s274 + $0xf0] sm:$0xff]
      %v314 = vld [vmem:[%s274 + $0xf8] sm:$0xff]
      %v315 = vpack.c.bf16 %v284, %v283
      %v316 = vpack.c.bf16 %v286, %v285
      %v317 = vpack.c.bf16 %v288, %v287
      %v318 = vpack.c.bf16 %v290, %v289
      %v319 = vpack.c.bf16 %v292, %v291
      %v320 = vpack.c.bf16 %v294, %v293
      %v321 = vpack.c.bf16 %v296, %v295
      %v322 = vpack.c.bf16 %v298, %v297
      %v323 = vpack.c.bf16 %v300, %v299
      %v324 = vpack.c.bf16 %v302, %v301
      %v325 = vpack.c.bf16 %v304, %v303
      %v326 = vpack.c.bf16 %v306, %v305
      %v327 = vpack.c.bf16 %v308, %v307
      %v328 = vpack.c.bf16 %v310, %v309
      %v329 = vpack.c.bf16 %v312, %v311
      %v330 = vpack.c.bf16 %v314, %v313
      %v331 = vld [vmem:[%s1] sm:$0xf]
      %v332 = vld [vmem:[%s1 + $0x4] sm:$0xf]
      %v333 = vld [vmem:[%s2] sm:$0x1]
      %v335 = vlaneseq
      %v336 = vshrl.u32 %v335, 7
      %v337 = vsub.s32 0, %v336
      %v338 = vrot.slane %v333, %v337
      %v342 = vunpack.c.l.b16 %v331
      %v343 = vunpack.c.l.b16 %v332
      %v344 = vpack.c.b16 %v343, %v342
      %vm346 = vcmask 130048
      %v348 = vsel %vm346, %v315, 0
      %v351 = vsel %vm346, %v316, 0
      %v354 = vsel %vm346, %v317, 0
      %v357 = vsel %vm346, %v318, 0
      %v360 = vsel %vm346, %v319, 0
      %v363 = vsel %vm346, %v320, 0
      %v366 = vsel %vm346, %v321, 0
      %v369 = vsel %vm346, %v322, 0
      %v372 = vsel %vm346, %v323, 0
      %v375 = vsel %vm346, %v324, 0
      %v378 = vsel %vm346, %v325, 0
      %v381 = vsel %vm346, %v326, 0
      %v384 = vsel %vm346, %v327, 0
      %v387 = vsel %vm346, %v328, 0
      %v390 = vsel %vm346, %v329, 0
      %v393 = vsel %vm346, %v330, 0
      %395 = vmatprep.subr.bf16.mxu0 0
      %396 = vmatpush1.bf16.msra.mxu0 %v344
      %397 = vmatprep.subr.bf16.mxu0 0
      %398 = vmatpush1.bf16.msra.mxu0 0
      %399 = vmatprep.subr.bf16.mxu0 0
      %400 = vmatpush1.bf16.msra.mxu0 0
      %401 = vmatprep.subr.bf16.mxu0 0
      %402 = vmatpush1.bf16.msra.mxu0 0
      %403 = vmatprep.subr.bf16.mxu0 0
      %404 = vmatpush1.bf16.msra.mxu0 0
      %405 = vmatprep.subr.bf16.mxu0 0
      %406 = vmatpush1.bf16.msra.mxu0 0
      %407 = vmatprep.subr.bf16.mxu0 0
      %408 = vmatpush1.bf16.msra.mxu0 0
      %409 = vmatprep.subr.bf16.mxu0 0
      %410 = vmatpush1.bf16.msra.mxu0 0
      %411 = vmatprep.subr.bf16.mxu0 0
      %412 = vmatpush1.bf16.msra.mxu0 0
      %413 = vmatprep.subr.bf16.mxu0 0
      %414 = vmatpush1.bf16.msra.mxu0 0
      %415 = vmatprep.subr.bf16.mxu0 0
      %416 = vmatpush1.bf16.msra.mxu0 0
      %417 = vmatprep.subr.bf16.mxu0 0
      %418 = vmatpush1.bf16.msra.mxu0 0
      %419 = vmatprep.subr.bf16.mxu0 0
      %420 = vmatpush1.bf16.msra.mxu0 0
      %421 = vmatprep.subr.bf16.mxu0 0
      %422 = vmatpush1.bf16.msra.mxu0 0
      %423 = vmatprep.subr.bf16.mxu0 0
      %424 = vmatpush1.bf16.msra.mxu0 0
      %425 = vmatprep.subr.bf16.mxu0 0
      %426 = vmatpush1.bf16.msra.mxu0 0
      %427 = vmatprep.mubr.bf16.mxu0 0
      %428 = vmatmul.mubr.bf16.gmra.mrb[0].mxu0 %v348
      %v429 = vpop.f32.mrb[0].mxu0
      %v430 = vadd.f32 %v338, %v429
      %v431 = vpop.f32.mrb[0].mxu0
      %v432 = vpop.f32.mrb[0].mxu0
      %v433 = vadd.f32 %v338, %v432
      %v434 = vpop.f32.mrb[0].mxu0
      %435 = vmatprep.mubr.bf16.mxu0 0
      %436 = vmatmul.mubr.bf16.gmra.mrb[0].mxu0 %v351
      %v437 = vpop.f32.mrb[0].mxu0
      %v438 = vadd.f32 %v338, %v437
      %v439 = vpop.f32.mrb[0].mxu0
      %v440 = vpop.f32.mrb[0].mxu0
      %v441 = vadd.f32 %v338, %v440
      %v442 = vpop.f32.mrb[0].mxu0
      %443 = vmatprep.mubr.bf16.mxu0 0
      %444 = vmatmul.mubr.bf16.gmra.mrb[0].mxu0 %v354
      %v445 = vpop.f32.mrb[0].mxu0
      %v446 = vadd.f32 %v338, %v445
      %v447 = vpop.f32.mrb[0].mxu0
      %v448 = vpop.f32.mrb[0].mxu0
      %v449 = vadd.f32 %v338, %v448
      %v450 = vpop.f32.mrb[0].mxu0
      %451 = vmatprep.mubr.bf16.mxu0 0
      %452 = vmatmul.mubr.bf16.gmra.mrb[0].mxu0 %v357
      %v453 = vpop.f32.mrb[0].mxu0
      %v454 = vadd.f32 %v338, %v453
      %v455 = vpop.f32.mrb[0].mxu0
      %v456 = vpop.f32.mrb[0].mxu0
      %v457 = vadd.f32 %v338, %v456
      %v458 = vpop.f32.mrb[0].mxu0
      %459 = vmatprep.mubr.bf16.mxu0 0
      %460 = vmatmul.mubr.bf16.gmra.mrb[0].mxu0 %v360
      %v461 = vpop.f32.mrb[0].mxu0
      %v462 = vadd.f32 %v338, %v461
      %v463 = vpop.f32.mrb[0].mxu0
      %v464 = vpop.f32.mrb[0].mxu0
      %v465 = vadd.f32 %v338, %v464
      %v466 = vpop.f32.mrb[0].mxu0
      %467 = vmatprep.mubr.bf16.mxu0 0
      %468 = vmatmul.mubr.bf16.gmra.mrb[0].mxu0 %v363
      %v469 = vpop.f32.mrb[0].mxu0
      %v470 = vadd.f32 %v338, %v469
      %v471 = vpop.f32.mrb[0].mxu0
      %v472 = vpop.f32.mrb[0].mxu0
      %v473 = vadd.f32 %v338, %v472
      %v474 = vpop.f32.mrb[0].mxu0
      %475 = vmatprep.mubr.bf16.mxu0 0
      %476 = vmatmul.mubr.bf16.gmra.mrb[0].mxu0 %v366
      %v477 = vpop.f32.mrb[0].mxu0
      %v478 = vadd.f32 %v338, %v477
      %v479 = vpop.f32.mrb[0].mxu0
      %v480 = vpop.f32.mrb[0].mxu0
      %v481 = vadd.f32 %v338, %v480
      %v482 = vpop.f32.mrb[0].mxu0
      %483 = vmatprep.mubr.bf16.mxu0 0
      %484 = vmatmul.mubr.bf16.gmra.mrb[0].mxu0 %v369
      %v485 = vpop.f32.mrb[0].mxu0
      %v486 = vadd.f32 %v338, %v485
      %v487 = vpop.f32.mrb[0].mxu0
      %v488 = vpop.f32.mrb[0].mxu0
      %v489 = vadd.f32 %v338, %v488
      %v490 = vpop.f32.mrb[0].mxu0
      %491 = vmatprep.mubr.bf16.mxu0 0
      %492 = vmatmul.mubr.bf16.gmra.mrb[0].mxu0 %v372
      %v493 = vpop.f32.mrb[0].mxu0
      %v494 = vadd.f32 %v338, %v493
      %v495 = vpop.f32.mrb[0].mxu0
      %v496 = vpop.f32.mrb[0].mxu0
      %v497 = vadd.f32 %v338, %v496
      %v498 = vpop.f32.mrb[0].mxu0
      %499 = vmatprep.mubr.bf16.mxu0 0
      %500 = vmatmul.mubr.bf16.gmra.mrb[0].mxu0 %v375
      %v501 = vpop.f32.mrb[0].mxu0
      %v502 = vadd.f32 %v338, %v501
      %v503 = vpop.f32.mrb[0].mxu0
      %v504 = vpop.f32.mrb[0].mxu0
      %v505 = vadd.f32 %v338, %v504
      %v506 = vpop.f32.mrb[0].mxu0
      %507 = vmatprep.mubr.bf16.mxu0 0
      %508 = vmatmul.mubr.bf16.gmra.mrb[0].mxu0 %v378
      %v509 = vpop.f32.mrb[0].mxu0
      %v510 = vadd.f32 %v338, %v509
      %v511 = vpop.f32.mrb[0].mxu0
      %v512 = vpop.f32.mrb[0].mxu0
      %v513 = vadd.f32 %v338, %v512
      %v514 = vpop.f32.mrb[0].mxu0
      %515 = vmatprep.mubr.bf16.mxu0 0
      %516 = vmatmul.mubr.bf16.gmra.mrb[0].mxu0 %v381
      %v517 = vpop.f32.mrb[0].mxu0
      %v518 = vadd.f32 %v338, %v517
      %v519 = vpop.f32.mrb[0].mxu0
      %v520 = vpop.f32.mrb[0].mxu0
      %v521 = vadd.f32 %v338, %v520
      %v522 = vpop.f32.mrb[0].mxu0
      %523 = vmatprep.mubr.bf16.mxu0 0
      %524 = vmatmul.mubr.bf16.gmra.mrb[0].mxu0 %v384
      %v525 = vpop.f32.mrb[0].mxu0
      %v526 = vadd.f32 %v338, %v525
      %v527 = vpop.f32.mrb[0].mxu0
      %v528 = vpop.f32.mrb[0].mxu0
      %v529 = vadd.f32 %v338, %v528
      %v530 = vpop.f32.mrb[0].mxu0
      %531 = vmatprep.mubr.bf16.mxu0 0
      %532 = vmatmul.mubr.bf16.gmra.mrb[0].mxu0 %v387
      %v533 = vpop.f32.mrb[0].mxu0
      %v534 = vadd.f32 %v338, %v533
      %v535 = vpop.f32.mrb[0].mxu0
      %v536 = vpop.f32.mrb[0].mxu0
      %v537 = vadd.f32 %v338, %v536
      %v538 = vpop.f32.mrb[0].mxu0
      %539 = vmatprep.mubr.bf16.mxu0 0
      %540 = vmatmul.mubr.bf16.gmra.mrb[0].mxu0 %v390
      %v541 = vpop.f32.mrb[0].mxu0
      %v542 = vadd.f32 %v338, %v541
      %v543 = vpop.f32.mrb[0].mxu0
      %v544 = vpop.f32.mrb[0].mxu0
      %v545 = vadd.f32 %v338, %v544
      %v546 = vpop.f32.mrb[0].mxu0
      %547 = vmatprep.mubr.bf16.mxu0 0
      %548 = vmatmul.mubr.bf16.gmra.mrb[0].mxu0 %v393
      %v549 = vpop.f32.mrb[0].mxu0
      %v550 = vadd.f32 %v338, %v549
      %v551 = vpop.f32.mrb[0].mxu0
      %v552 = vpop.f32.mrb[0].mxu0
      %v553 = vadd.f32 %v338, %v552
      %v554 = vpop.f32.mrb[0].mxu0
      %555 = vdwg.mxu0
      %v556 = vmax.f32 %v430, 0.0
      %v557 = vmax.f32 %v433, 0.0
      %v558 = vmax.f32 %v438, 0.0
      %v559 = vmax.f32 %v441, 0.0
      %v560 = vmax.f32 %v446, 0.0
      %v561 = vmax.f32 %v449, 0.0
      %v562 = vmax.f32 %v454, 0.0
      %v563 = vmax.f32 %v457, 0.0
      %v564 = vmax.f32 %v462, 0.0
      %v565 = vmax.f32 %v465, 0.0
      %v566 = vmax.f32 %v470, 0.0
      %v567 = vmax.f32 %v473, 0.0
      %v568 = vmax.f32 %v478, 0.0
      %v569 = vmax.f32 %v481, 0.0
      %v570 = vmax.f32 %v486, 0.0
      %v571 = vmax.f32 %v489, 0.0
      %v572 = vmax.f32 %v494, 0.0
      %v573 = vmax.f32 %v497, 0.0
      %v574 = vmax.f32 %v502, 0.0
      %v575 = vmax.f32 %v505, 0.0
      %v576 = vmax.f32 %v510, 0.0
      %v577 = vmax.f32 %v513, 0.0
      %v578 = vmax.f32 %v518, 0.0
      %v579 = vmax.f32 %v521, 0.0
      %v580 = vmax.f32 %v526, 0.0
      %v581 = vmax.f32 %v529, 0.0
      %v582 = vmax.f32 %v534, 0.0
      %v583 = vmax.f32 %v537, 0.0
      %v584 = vmax.f32 %v542, 0.0
      %v585 = vmax.f32 %v545, 0.0
      %v586 = vmax.f32 %v550, 0.0
      %v587 = vmax.f32 %v553, 0.0
      %v588 = vpack.c.bf16 %v557, %v556
      %v589 = vpack.c.bf16 %v559, %v558
      %v590 = vpack.c.bf16 %v561, %v560
      %v591 = vpack.c.bf16 %v563, %v562
      %v592 = vpack.c.bf16 %v565, %v564
      %v593 = vpack.c.bf16 %v567, %v566
      %v594 = vpack.c.bf16 %v569, %v568
      %v595 = vpack.c.bf16 %v571, %v570
      %v596 = vpack.c.bf16 %v573, %v572
      %v597 = vpack.c.bf16 %v575, %v574
      %v598 = vpack.c.bf16 %v577, %v576
      %v599 = vpack.c.bf16 %v579, %v578
      %v600 = vpack.c.bf16 %v581, %v580
      %v601 = vpack.c.bf16 %v583, %v582
      %v602 = vpack.c.bf16 %v585, %v584
      %v603 = vpack.c.bf16 %v587, %v586
      %v604 = vld [vmem:[%s3] sm:$0xf]
      %v605 = vld [vmem:[%s3 + $0x4] sm:$0xf]
      %v606 = vld [vmem:[%s3 + $0x8] sm:$0xf]
      %v607 = vld [vmem:[%s3 + $0xc] sm:$0xf]
      %v608 = vld [vmem:[%s3 + $0x10] sm:$0xf]
      %v609 = vld [vmem:[%s3 + $0x14] sm:$0xf]
      %v610 = vld [vmem:[%s3 + $0x18] sm:$0xf]
      %v611 = vld [vmem:[%s3 + $0x1c] sm:$0xf]
      %v612 = vld [vmem:[%s4] sm:$0x1]
      %v614 = vlaneseq
      %v615 = vshrl.u32 %v614, 7
      %v616 = vsub.s32 0, %v615
      %v617 = vrot.slane %v612, %v616
      %v627 = vunpack.c.l.b16 %v604
      %v628 = vunpack.c.l.b16 %v605
      %v629 = vunpack.c.l.b16 %v606
      %v630 = vunpack.c.l.b16 %v607
      %v631 = vunpack.c.l.b16 %v608
      %v632 = vunpack.c.l.b16 %v609
      %v633 = vunpack.c.l.b16 %v610
      %v634 = vunpack.c.l.b16 %v611
      %v635 = vpack.c.b16 %v628, %v627
      %v636 = vpack.c.b16 %v630, %v629
      %v637 = vpack.c.b16 %v632, %v631
      %v638 = vpack.c.b16 %v634, %v633
      %vm643 = vcmask 523264
      %v645 = vsel %vm643, %v588, 0
      %v648 = vsel %vm643, %v589, 0
      %v651 = vsel %vm643, %v590, 0
      %v654 = vsel %vm643, %v591, 0
      %v657 = vsel %vm643, %v592, 0
      %v660 = vsel %vm643, %v593, 0
      %v663 = vsel %vm643, %v594, 0
      %v666 = vsel %vm643, %v595, 0
      %v669 = vsel %vm643, %v596, 0
      %v672 = vsel %vm643, %v597, 0
      %v675 = vsel %vm643, %v598, 0
      %v678 = vsel %vm643, %v599, 0
      %v681 = vsel %vm643, %v600, 0
      %v684 = vsel %vm643, %v601, 0
      %v687 = vsel %vm643, %v602, 0
      %v690 = vsel %vm643, %v603, 0
      %692 = vmatprep.subr.bf16.mxu0 0
      %693 = vmatpush1.bf16.msra.mxu0 %v635
      %694 = vmatprep.subr.bf16.mxu0 0
      %695 = vmatpush1.bf16.msra.mxu0 %v636
      %696 = vmatprep.subr.bf16.mxu0 0
      %697 = vmatpush1.bf16.msra.mxu0 %v637
      %698 = vmatprep.subr.bf16.mxu0 0
      %699 = vmatpush1.bf16.msra.mxu0 %v638
      %700 = vmatprep.subr.bf16.mxu0 0
      %701 = vmatpush1.bf16.msra.mxu0 0
      %702 = vmatprep.subr.bf16.mxu0 0
      %703 = vmatpush1.bf16.msra.mxu0 0
      %704 = vmatprep.subr.bf16.mxu0 0
      %705 = vmatpush1.bf16.msra.mxu0 0
      %706 = vmatprep.subr.bf16.mxu0 0
      %707 = vmatpush1.bf16.msra.mxu0 0
      %708 = vmatprep.subr.bf16.mxu0 0
      %709 = vmatpush1.bf16.msra.mxu0 0
      %710 = vmatprep.subr.bf16.mxu0 0
      %711 = vmatpush1.bf16.msra.mxu0 0
      %712 = vmatprep.subr.bf16.mxu0 0
      %713 = vmatpush1.bf16.msra.mxu0 0
      %714 = vmatprep.subr.bf16.mxu0 0
      %715 = vmatpush1.bf16.msra.mxu0 0
      %716 = vmatprep.subr.bf16.mxu0 0
      %717 = vmatpush1.bf16.msra.mxu0 0
      %718 = vmatprep.subr.bf16.mxu0 0
      %719 = vmatpush1.bf16.msra.mxu0 0
      %720 = vmatprep.subr.bf16.mxu0 0
      %721 = vmatpush1.bf16.msra.mxu0 0
      %722 = vmatprep.subr.bf16.mxu0 0
      %723 = vmatpush1.bf16.msra.mxu0 0
      %724 = vmatprep.mubr.bf16.mxu0 0
      %725 = vmatmul.mubr.bf16.gmra.mrb[0].mxu0 %v645
      %v726 = vpop.f32.mrb[0].mxu0
      %v727 = vadd.f32 %v617, %v726
      %v728 = vpop.f32.mrb[0].mxu0
      %v729 = vpop.f32.mrb[0].mxu0
      %v730 = vadd.f32 %v617, %v729
      %v731 = vpop.f32.mrb[0].mxu0
      %732 = vmatprep.mubr.bf16.mxu0 0
      %733 = vmatmul.mubr.bf16.gmra.mrb[0].mxu0 %v648
      %v734 = vpop.f32.mrb[0].mxu0
      %v735 = vadd.f32 %v617, %v734
      %v736 = vpop.f32.mrb[0].mxu0
      %v737 = vpop.f32.mrb[0].mxu0
      %v738 = vadd.f32 %v617, %v737
      %v739 = vpop.f32.mrb[0].mxu0
      %740 = vmatprep.mubr.bf16.mxu0 0
      %741 = vmatmul.mubr.bf16.gmra.mrb[0].mxu0 %v651
      %v742 = vpop.f32.mrb[0].mxu0
      %v743 = vadd.f32 %v617, %v742
      %v744 = vpop.f32.mrb[0].mxu0
      %v745 = vpop.f32.mrb[0].mxu0
      %v746 = vadd.f32 %v617, %v745
      %v747 = vpop.f32.mrb[0].mxu0
      %748 = vmatprep.mubr.bf16.mxu0 0
      %749 = vmatmul.mubr.bf16.gmra.mrb[0].mxu0 %v654
      %v750 = vpop.f32.mrb[0].mxu0
      %v751 = vadd.f32 %v617, %v750
      %v752 = vpop.f32.mrb[0].mxu0
      %v753 = vpop.f32.mrb[0].mxu0
      %v754 = vadd.f32 %v617, %v753
      %v755 = vpop.f32.mrb[0].mxu0
      %756 = vmatprep.mubr.bf16.mxu0 0
      %757 = vmatmul.mubr.bf16.gmra.mrb[0].mxu0 %v657
      %v758 = vpop.f32.mrb[0].mxu0
      %v759 = vadd.f32 %v617, %v758
      %v760 = vpop.f32.mrb[0].mxu0
      %v761 = vpop.f32.mrb[0].mxu0
      %v762 = vadd.f32 %v617, %v761
      %v763 = vpop.f32.mrb[0].mxu0
      %764 = vmatprep.mubr.bf16.mxu0 0
      %765 = vmatmul.mubr.bf16.gmra.mrb[0].mxu0 %v660
      %v766 = vpop.f32.mrb[0].mxu0
      %v767 = vadd.f32 %v617, %v766
      %v768 = vpop.f32.mrb[0].mxu0
      %v769 = vpop.f32.mrb[0].mxu0
      %v770 = vadd.f32 %v617, %v769
      %v771 = vpop.f32.mrb[0].mxu0
      %772 = vmatprep.mubr.bf16.mxu0 0
      %773 = vmatmul.mubr.bf16.gmra.mrb[0].mxu0 %v663
      %v774 = vpop.f32.mrb[0].mxu0
      %v775 = vadd.f32 %v617, %v774
      %v776 = vpop.f32.mrb[0].mxu0
      %v777 = vpop.f32.mrb[0].mxu0
      %v778 = vadd.f32 %v617, %v777
      %v779 = vpop.f32.mrb[0].mxu0
      %780 = vmatprep.mubr.bf16.mxu0 0
      %781 = vmatmul.mubr.bf16.gmra.mrb[0].mxu0 %v666
      %v782 = vpop.f32.mrb[0].mxu0
      %v783 = vadd.f32 %v617, %v782
      %v784 = vpop.f32.mrb[0].mxu0
      %v785 = vpop.f32.mrb[0].mxu0
      %v786 = vadd.f32 %v617, %v785
      %v787 = vpop.f32.mrb[0].mxu0
      %788 = vmatprep.mubr.bf16.mxu0 0
      %789 = vmatmul.mubr.bf16.gmra.mrb[0].mxu0 %v669
      %v790 = vpop.f32.mrb[0].mxu0
      %v791 = vadd.f32 %v617, %v790
      %v792 = vpop.f32.mrb[0].mxu0
      %v793 = vpop.f32.mrb[0].mxu0
      %v794 = vadd.f32 %v617, %v793
      %v795 = vpop.f32.mrb[0].mxu0
      %796 = vmatprep.mubr.bf16.mxu0 0
      %797 = vmatmul.mubr.bf16.gmra.mrb[0].mxu0 %v672
      %v798 = vpop.f32.mrb[0].mxu0
      %v799 = vadd.f32 %v617, %v798
      %v800 = vpop.f32.mrb[0].mxu0
      %v801 = vpop.f32.mrb[0].mxu0
      %v802 = vadd.f32 %v617, %v801
      %v803 = vpop.f32.mrb[0].mxu0
      %804 = vmatprep.mubr.bf16.mxu0 0
      %805 = vmatmul.mubr.bf16.gmra.mrb[0].mxu0 %v675
      %v806 = vpop.f32.mrb[0].mxu0
      %v807 = vadd.f32 %v617, %v806
      %v808 = vpop.f32.mrb[0].mxu0
      %v809 = vpop.f32.mrb[0].mxu0
      %v810 = vadd.f32 %v617, %v809
      %v811 = vpop.f32.mrb[0].mxu0
      %812 = vmatprep.mubr.bf16.mxu0 0
      %813 = vmatmul.mubr.bf16.gmra.mrb[0].mxu0 %v678
      %v814 = vpop.f32.mrb[0].mxu0
      %v815 = vadd.f32 %v617, %v814
      %v816 = vpop.f32.mrb[0].mxu0
      %v817 = vpop.f32.mrb[0].mxu0
      %v818 = vadd.f32 %v617, %v817
      %v819 = vpop.f32.mrb[0].mxu0
      %820 = vmatprep.mubr.bf16.mxu0 0
      %821 = vmatmul.mubr.bf16.gmra.mrb[0].mxu0 %v681
      %v822 = vpop.f32.mrb[0].mxu0
      %v823 = vadd.f32 %v617, %v822
      %v824 = vpop.f32.mrb[0].mxu0
      %v825 = vpop.f32.mrb[0].mxu0
      %v826 = vadd.f32 %v617, %v825
      %v827 = vpop.f32.mrb[0].mxu0
      %828 = vmatprep.mubr.bf16.mxu0 0
      %829 = vmatmul.mubr.bf16.gmra.mrb[0].mxu0 %v684
      %v830 = vpop.f32.mrb[0].mxu0
      %v831 = vadd.f32 %v617, %v830
      %v832 = vpop.f32.mrb[0].mxu0
      %v833 = vpop.f32.mrb[0].mxu0
      %v834 = vadd.f32 %v617, %v833
      %v835 = vpop.f32.mrb[0].mxu0
      %836 = vmatprep.mubr.bf16.mxu0 0
      %837 = vmatmul.mubr.bf16.gmra.mrb[0].mxu0 %v687
      %v838 = vpop.f32.mrb[0].mxu0
      %v839 = vadd.f32 %v617, %v838
      %v840 = vpop.f32.mrb[0].mxu0
      %v841 = vpop.f32.mrb[0].mxu0
      %v842 = vadd.f32 %v617, %v841
      %v843 = vpop.f32.mrb[0].mxu0
      %844 = vmatprep.mubr.bf16.mxu0 0
      %845 = vmatmul.mubr.bf16.gmra.mrb[0].mxu0 %v690
      %v846 = vpop.f32.mrb[0].mxu0
      %v847 = vadd.f32 %v617, %v846
      %v848 = vpop.f32.mrb[0].mxu0
      %v849 = vpop.f32.mrb[0].mxu0
      %v850 = vadd.f32 %v617, %v849
      %v851 = vpop.f32.mrb[0].mxu0
      %852 = vdwg.mxu0
      %v853 = vmax.f32 %v727, 0.0
      %v854 = vmax.f32 %v730, 0.0
      %v855 = vmax.f32 %v735, 0.0
      %v856 = vmax.f32 %v738, 0.0
      %v857 = vmax.f32 %v743, 0.0
      %v858 = vmax.f32 %v746, 0.0
      %v859 = vmax.f32 %v751, 0.0
      %v860 = vmax.f32 %v754, 0.0
      %v861 = vmax.f32 %v759, 0.0
      %v862 = vmax.f32 %v762, 0.0
      %v863 = vmax.f32 %v767, 0.0
      %v864 = vmax.f32 %v770, 0.0
      %v865 = vmax.f32 %v775, 0.0
      %v866 = vmax.f32 %v778, 0.0
      %v867 = vmax.f32 %v783, 0.0
      %v868 = vmax.f32 %v786, 0.0
      %v869 = vmax.f32 %v791, 0.0
      %v870 = vmax.f32 %v794, 0.0
      %v871 = vmax.f32 %v799, 0.0
      %v872 = vmax.f32 %v802, 0.0
      %v873 = vmax.f32 %v807, 0.0
      %v874 = vmax.f32 %v810, 0.0
      %v875 = vmax.f32 %v815, 0.0
      %v876 = vmax.f32 %v818, 0.0
      %v877 = vmax.f32 %v823, 0.0
      %v878 = vmax.f32 %v826, 0.0
      %v879 = vmax.f32 %v831, 0.0
      %v880 = vmax.f32 %v834, 0.0
      %v881 = vmax.f32 %v839, 0.0
      %v882 = vmax.f32 %v842, 0.0
      %v883 = vmax.f32 %v847, 0.0
      %v884 = vmax.f32 %v850, 0.0
      %v885 = vpack.c.bf16 %v854, %v853
      %v886 = vpack.c.bf16 %v856, %v855
      %v887 = vpack.c.bf16 %v858, %v857
      %v888 = vpack.c.bf16 %v860, %v859
      %v889 = vpack.c.bf16 %v862, %v861
      %v890 = vpack.c.bf16 %v864, %v863
      %v891 = vpack.c.bf16 %v866, %v865
      %v892 = vpack.c.bf16 %v868, %v867
      %v893 = vpack.c.bf16 %v870, %v869
      %v894 = vpack.c.bf16 %v872, %v871
      %v895 = vpack.c.bf16 %v874, %v873
      %v896 = vpack.c.bf16 %v876, %v875
      %v897 = vpack.c.bf16 %v878, %v877
      %v898 = vpack.c.bf16 %v880, %v879
      %v899 = vpack.c.bf16 %v882, %v881
      %v900 = vpack.c.bf16 %v884, %v883
      %v901 = vld [vmem:[%s5] sm:$0xf]
      %v902 = vld [vmem:[%s5 + $0x4] sm:$0xf]
      %v903 = vld [vmem:[%s5 + $0x8] sm:$0xf]
      %v904 = vld [vmem:[%s5 + $0xc] sm:$0xf]
      %v905 = vld [vmem:[%s6] sm:$0x1]
      %v907 = vlaneseq
      %v908 = vshrl.u32 %v907, 7
      %v909 = vsub.s32 0, %v908
      %v910 = vrot.slane %v905, %v909
      %v916 = vunpack.c.l.b16 %v901
      %v917 = vunpack.c.l.b16 %v902
      %v918 = vunpack.c.l.b16 %v903
      %v919 = vunpack.c.l.b16 %v904
      %v920 = vpack.c.b16 %v917, %v916
      %v921 = vpack.c.b16 %v919, %v918
      %vm924 = vcmask 261120
      %v926 = vsel %vm924, %v885, 0
      %v929 = vsel %vm924, %v886, 0
      %v932 = vsel %vm924, %v887, 0
      %v935 = vsel %vm924, %v888, 0
      %v938 = vsel %vm924, %v889, 0
      %v941 = vsel %vm924, %v890, 0
      %v944 = vsel %vm924, %v891, 0
      %v947 = vsel %vm924, %v892, 0
      %v950 = vsel %vm924, %v893, 0
      %v953 = vsel %vm924, %v894, 0
      %v956 = vsel %vm924, %v895, 0
      %v959 = vsel %vm924, %v896, 0
      %v962 = vsel %vm924, %v897, 0
      %v965 = vsel %vm924, %v898, 0
      %v968 = vsel %vm924, %v899, 0
      %v971 = vsel %vm924, %v900, 0
      %973 = vmatprep.subr.bf16.mxu0 0
      %974 = vmatpush1.bf16.msra.mxu0 %v920
      %975 = vmatprep.subr.bf16.mxu0 0
      %976 = vmatpush1.bf16.msra.mxu0 %v921
      %977 = vmatprep.subr.bf16.mxu0 0
      %978 = vmatpush1.bf16.msra.mxu0 0
      %979 = vmatprep.subr.bf16.mxu0 0
      %980 = vmatpush1.bf16.msra.mxu0 0
      %981 = vmatprep.subr.bf16.mxu0 0
      %982 = vmatpush1.bf16.msra.mxu0 0
      %983 = vmatprep.subr.bf16.mxu0 0
      %984 = vmatpush1.bf16.msra.mxu0 0
      %985 = vmatprep.subr.bf16.mxu0 0
      %986 = vmatpush1.bf16.msra.mxu0 0
      %987 = vmatprep.subr.bf16.mxu0 0
      %988 = vmatpush1.bf16.msra.mxu0 0
      %989 = vmatprep.subr.bf16.mxu0 0
      %990 = vmatpush1.bf16.msra.mxu0 0
      %991 = vmatprep.subr.bf16.mxu0 0
      %992 = vmatpush1.bf16.msra.mxu0 0
      %993 = vmatprep.subr.bf16.mxu0 0
      %994 = vmatpush1.bf16.msra.mxu0 0
      %995 = vmatprep.subr.bf16.mxu0 0
      %996 = vmatpush1.bf16.msra.mxu0 0
      %997 = vmatprep.subr.bf16.mxu0 0
      %998 = vmatpush1.bf16.msra.mxu0 0
      %999 = vmatprep.subr.bf16.mxu0 0
      %1000 = vmatpush1.bf16.msra.mxu0 0
      %1001 = vmatprep.subr.bf16.mxu0 0
      %1002 = vmatpush1.bf16.msra.mxu0 0
      %1003 = vmatprep.subr.bf16.mxu0 0
      %1004 = vmatpush1.bf16.msra.mxu0 0
      %1005 = vmatprep.mubr.bf16.mxu0 0
      %1006 = vmatmul.mubr.bf16.gmra.mrb[0].mxu0 %v926
      %v1007 = vpop.f32.mrb[0].mxu0
      %v1008 = vadd.f32 %v910, %v1007
      %v1009 = vpop.f32.mrb[0].mxu0
      %v1010 = vpop.f32.mrb[0].mxu0
      %v1011 = vadd.f32 %v910, %v1010
      %v1012 = vpop.f32.mrb[0].mxu0
      %1013 = vmatprep.mubr.bf16.mxu0 0
      %1014 = vmatmul.mubr.bf16.gmra.mrb[0].mxu0 %v929
      %v1015 = vpop.f32.mrb[0].mxu0
      %v1016 = vadd.f32 %v910, %v1015
      %v1017 = vpop.f32.mrb[0].mxu0
      %v1018 = vpop.f32.mrb[0].mxu0
      %v1019 = vadd.f32 %v910, %v1018
      %v1020 = vpop.f32.mrb[0].mxu0
      %1021 = vmatprep.mubr.bf16.mxu0 0
      %1022 = vmatmul.mubr.bf16.gmra.mrb[0].mxu0 %v932
      %v1023 = vpop.f32.mrb[0].mxu0
      %v1024 = vadd.f32 %v910, %v1023
      %v1025 = vpop.f32.mrb[0].mxu0
      %v1026 = vpop.f32.mrb[0].mxu0
      %v1027 = vadd.f32 %v910, %v1026
      %v1028 = vpop.f32.mrb[0].mxu0
      %1029 = vmatprep.mubr.bf16.mxu0 0
      %1030 = vmatmul.mubr.bf16.gmra.mrb[0].mxu0 %v935
      %v1031 = vpop.f32.mrb[0].mxu0
      %v1032 = vadd.f32 %v910, %v1031
      %v1033 = vpop.f32.mrb[0].mxu0
      %v1034 = vpop.f32.mrb[0].mxu0
      %v1035 = vadd.f32 %v910, %v1034
      %v1036 = vpop.f32.mrb[0].mxu0
      %1037 = vmatprep.mubr.bf16.mxu0 0
      %1038 = vmatmul.mubr.bf16.gmra.mrb[0].mxu0 %v938
      %v1039 = vpop.f32.mrb[0].mxu0
      %v1040 = vadd.f32 %v910, %v1039
      %v1041 = vpop.f32.mrb[0].mxu0
      %v1042 = vpop.f32.mrb[0].mxu0
      %v1043 = vadd.f32 %v910, %v1042
      %v1044 = vpop.f32.mrb[0].mxu0
      %1045 = vmatprep.mubr.bf16.mxu0 0
      %1046 = vmatmul.mubr.bf16.gmra.mrb[0].mxu0 %v941
      %v1047 = vpop.f32.mrb[0].mxu0
      %v1048 = vadd.f32 %v910, %v1047
      %v1049 = vpop.f32.mrb[0].mxu0
      %v1050 = vpop.f32.mrb[0].mxu0
      %v1051 = vadd.f32 %v910, %v1050
      %v1052 = vpop.f32.mrb[0].mxu0
      %1053 = vmatprep.mubr.bf16.mxu0 0
      %1054 = vmatmul.mubr.bf16.gmra.mrb[0].mxu0 %v944
      %v1055 = vpop.f32.mrb[0].mxu0
      %v1056 = vadd.f32 %v910, %v1055
      %v1057 = vpop.f32.mrb[0].mxu0
      %v1058 = vpop.f32.mrb[0].mxu0
      %v1059 = vadd.f32 %v910, %v1058
      %v1060 = vpop.f32.mrb[0].mxu0
      %1061 = vmatprep.mubr.bf16.mxu0 0
      %1062 = vmatmul.mubr.bf16.gmra.mrb[0].mxu0 %v947
      %v1063 = vpop.f32.mrb[0].mxu0
      %v1064 = vadd.f32 %v910, %v1063
      %v1065 = vpop.f32.mrb[0].mxu0
      %v1066 = vpop.f32.mrb[0].mxu0
      %v1067 = vadd.f32 %v910, %v1066
      %v1068 = vpop.f32.mrb[0].mxu0
      %1069 = vmatprep.mubr.bf16.mxu0 0
      %1070 = vmatmul.mubr.bf16.gmra.mrb[0].mxu0 %v950
      %v1071 = vpop.f32.mrb[0].mxu0
      %v1072 = vadd.f32 %v910, %v1071
      %v1073 = vpop.f32.mrb[0].mxu0
      %v1074 = vpop.f32.mrb[0].mxu0
      %v1075 = vadd.f32 %v910, %v1074
      %v1076 = vpop.f32.mrb[0].mxu0
      %1077 = vmatprep.mubr.bf16.mxu0 0
      %1078 = vmatmul.mubr.bf16.gmra.mrb[0].mxu0 %v953
      %v1079 = vpop.f32.mrb[0].mxu0
      %v1080 = vadd.f32 %v910, %v1079
      %v1081 = vpop.f32.mrb[0].mxu0
      %v1082 = vpop.f32.mrb[0].mxu0
      %v1083 = vadd.f32 %v910, %v1082
      %v1084 = vpop.f32.mrb[0].mxu0
      %1085 = vmatprep.mubr.bf16.mxu0 0
      %1086 = vmatmul.mubr.bf16.gmra.mrb[0].mxu0 %v956
      %v1087 = vpop.f32.mrb[0].mxu0
      %v1088 = vadd.f32 %v910, %v1087
      %v1089 = vpop.f32.mrb[0].mxu0
      %v1090 = vpop.f32.mrb[0].mxu0
      %v1091 = vadd.f32 %v910, %v1090
      %v1092 = vpop.f32.mrb[0].mxu0
      %1093 = vmatprep.mubr.bf16.mxu0 0
      %1094 = vmatmul.mubr.bf16.gmra.mrb[0].mxu0 %v959
      %v1095 = vpop.f32.mrb[0].mxu0
      %v1096 = vadd.f32 %v910, %v1095
      %v1097 = vpop.f32.mrb[0].mxu0
      %v1098 = vpop.f32.mrb[0].mxu0
      %v1099 = vadd.f32 %v910, %v1098
      %v1100 = vpop.f32.mrb[0].mxu0
      %1101 = vmatprep.mubr.bf16.mxu0 0
      %1102 = vmatmul.mubr.bf16.gmra.mrb[0].mxu0 %v962
      %v1103 = vpop.f32.mrb[0].mxu0
      %v1104 = vadd.f32 %v910, %v1103
      %v1105 = vpop.f32.mrb[0].mxu0
      %v1106 = vpop.f32.mrb[0].mxu0
      %v1107 = vadd.f32 %v910, %v1106
      %v1108 = vpop.f32.mrb[0].mxu0
      %1109 = vmatprep.mubr.bf16.mxu0 0
      %1110 = vmatmul.mubr.bf16.gmra.mrb[0].mxu0 %v965
      %v1111 = vpop.f32.mrb[0].mxu0
      %v1112 = vadd.f32 %v910, %v1111
      %v1113 = vpop.f32.mrb[0].mxu0
      %v1114 = vpop.f32.mrb[0].mxu0
      %v1115 = vadd.f32 %v910, %v1114
      %v1116 = vpop.f32.mrb[0].mxu0
      %1117 = vmatprep.mubr.bf16.mxu0 0
      %1118 = vmatmul.mubr.bf16.gmra.mrb[0].mxu0 %v968
      %v1119 = vpop.f32.mrb[0].mxu0
      %v1120 = vadd.f32 %v910, %v1119
      %v1121 = vpop.f32.mrb[0].mxu0
      %v1122 = vpop.f32.mrb[0].mxu0
      %v1123 = vadd.f32 %v910, %v1122
      %v1124 = vpop.f32.mrb[0].mxu0
      %1125 = vmatprep.mubr.bf16.mxu0 0
      %1126 = vmatmul.mubr.bf16.gmra.mrb[0].mxu0 %v971
      %v1127 = vpop.f32.mrb[0].mxu0
      %v1128 = vadd.f32 %v910, %v1127
      %v1129 = vpop.f32.mrb[0].mxu0
      %v1130 = vpop.f32.mrb[0].mxu0
      %v1131 = vadd.f32 %v910, %v1130
      %v1132 = vpop.f32.mrb[0].mxu0
      %1133 = vdwg.mxu0
      %vm1134 = vcmask 15360
      %1135 = vst.msk [vmem:[%s280] sm:$0xff] %vm1134, %v1008
      %1136 = vst.msk [vmem:[%s280 + $0x8] sm:$0xff] %vm1134, %v1011
      %1137 = vst.msk [vmem:[%s280 + $0x10] sm:$0xff] %vm1134, %v1016
      %1138 = vst.msk [vmem:[%s280 + $0x18] sm:$0xff] %vm1134, %v1019
      %1139 = vst.msk [vmem:[%s280 + $0x20] sm:$0xff] %vm1134, %v1024
      %1140 = vst.msk [vmem:[%s280 + $0x28] sm:$0xff] %vm1134, %v1027
      %1141 = vst.msk [vmem:[%s280 + $0x30] sm:$0xff] %vm1134, %v1032
      %1142 = vst.msk [vmem:[%s280 + $0x38] sm:$0xff] %vm1134, %v1035
      %1143 = vst.msk [vmem:[%s280 + $0x40] sm:$0xff] %vm1134, %v1040
      %1144 = vst.msk [vmem:[%s280 + $0x48] sm:$0xff] %vm1134, %v1043
      %1145 = vst.msk [vmem:[%s280 + $0x50] sm:$0xff] %vm1134, %v1048
      %1146 = vst.msk [vmem:[%s280 + $0x58] sm:$0xff] %vm1134, %v1051
      %1147 = vst.msk [vmem:[%s280 + $0x60] sm:$0xff] %vm1134, %v1056
      %1148 = vst.msk [vmem:[%s280 + $0x68] sm:$0xff] %vm1134, %v1059
      %1149 = vst.msk [vmem:[%s280 + $0x70] sm:$0xff] %vm1134, %v1064
      %1150 = vst.msk [vmem:[%s280 + $0x78] sm:$0xff] %vm1134, %v1067
      %1151 = vst.msk [vmem:[%s280 + $0x80] sm:$0xff] %vm1134, %v1072
      %1152 = vst.msk [vmem:[%s280 + $0x88] sm:$0xff] %vm1134, %v1075
      %1153 = vst.msk [vmem:[%s280 + $0x90] sm:$0xff] %vm1134, %v1080
      %1154 = vst.msk [vmem:[%s280 + $0x98] sm:$0xff] %vm1134, %v1083
      %1155 = vst.msk [vmem:[%s280 + $0xa0] sm:$0xff] %vm1134, %v1088
      %1156 = vst.msk [vmem:[%s280 + $0xa8] sm:$0xff] %vm1134, %v1091
      %1157 = vst.msk [vmem:[%s280 + $0xb0] sm:$0xff] %vm1134, %v1096
      %1158 = vst.msk [vmem:[%s280 + $0xb8] sm:$0xff] %vm1134, %v1099
      %1159 = vst.msk [vmem:[%s280 + $0xc0] sm:$0xff] %vm1134, %v1104
      %1160 = vst.msk [vmem:[%s280 + $0xc8] sm:$0xff] %vm1134, %v1107
      %1161 = vst.msk [vmem:[%s280 + $0xd0] sm:$0xff] %vm1134, %v1112
      %1162 = vst.msk [vmem:[%s280 + $0xd8] sm:$0xff] %vm1134, %v1115
      %1163 = vst.msk [vmem:[%s280 + $0xe0] sm:$0xff] %vm1134, %v1120
      %1164 = vst.msk [vmem:[%s280 + $0xe8] sm:$0xff] %vm1134, %v1123
      %1165 = vst.msk [vmem:[%s280 + $0xf0] sm:$0xff] %vm1134, %v1128
      %1166 = vst.msk [vmem:[%s280 + $0xf8] sm:$0xff] %vm1134, %v1131
      %s1167 = smul.u32 32, %s18
      %p1168 = scmp.lt.s32.totalorder %s1167, 63
      %s1169 = scalar_select %p1168, %s1167, 63
      %s1170 = smul.addr %s1169, 8
      %s1171 = scalar_lea.vmem %s7, %s1170
      // Predicated region
      $region49: #{tpu_custom_call.1} parent=47 // pred_check
        %p1172 = pneg %p188
      $region50: #{tpu_custom_call.1} parent=47 // pred_check_branch
        %1174 = sbr.rel (%p1172) target = $region52
      $region51: #{tpu_custom_call.1} parent=47 // pred_region
        %s1175 = smul.u32 32, %s18
      $region52: #{tpu_custom_call.1} parent=47 // pred_fallthru
        _
    $region48: #{tpu_custom_call.1} parent=5 // pred_fallthru
      _
    %p1176 = scmp.le.s32.totalorder 2, %s13
    // Predicated region
    $region53: #{tpu_custom_call.1} parent=5 // pred_check
      %p1177 = pneg %p1176
    $region54: #{tpu_custom_call.1} parent=5 // pred_check_branch
      %1179 = sbr.rel (%p1177) target = $region56
    $region55: #{tpu_custom_call.1} parent=5 // pred_region
      %s1180 = ssub.s32 %s13, 2
      // Predicated region
      $region57: #{tpu_custom_call.1} parent=55 // pred_check
        %p1181 = pneg %p194
      $region58: #{tpu_custom_call.1} parent=55 // pred_check_branch
        %1183 = sbr.rel (%p1181) target = $region60
      $region59: #{tpu_custom_call.1} parent=55 // pred_region
        %s1184 = smul.u32 32, %s19
        %p1185 = scmp.lt.s32.totalorder %s1184, 63
        %s1186 = scalar_select %p1185, %s1184, 63
        %s1187 = smul.addr %s1186, 8
        %s1188 = scalar_lea.vmem %s7, %s1187
      $region60: #{tpu_custom_call.1} parent=55 // pred_fallthru
        _
    $region56: #{tpu_custom_call.1} parent=5 // pred_fallthru
      _
  $region6: #{tpu_custom_call.1} parent=0 // loop_footer
    %s17 = sadd.s32 1, %s13
  $region7: #{tpu_custom_call.1} parent=0 // loop_footer_branch
    %12 = sbr.rel target = $region3
  $region8: #{tpu_custom_call.1} parent=0 // loop_exit
    _

</llo_original>
